<compile_context>
chip_gen: v5e
topology: v5e:2x2
jax: 0.10.0
libtpu: 0.0.40
codegen_flags: <defaults>
</compile_context>

<pallas_src>
import jax
import jax.numpy as jnp
from jax import lax
from jax.experimental import pallas as pl
from jax.experimental.pallas import tpu as pltpu


def _round_up(x, m):
    return (x + m - 1) // m * m


def _cdiv(a, b):
    return -(-a // b)


# --------------------------------------------------------------------------
# Kernel
# --------------------------------------------------------------------------
def mlp_kernel(x_ref, w1_ref, b1_ref, w2_ref, b2_ref, w3_ref, b3_ref, o_ref):
    """One batch tile of the MLP.

    x_ref : (TM, D)    compute dtype (f32 or bf16)
    w*_ref: VMEM-resident weights (compute dtype); b*_ref: resident f32 biases
    o_ref : (1, TM)    f32 lane-dense output row (one scalar per batch row)
    """
    cd = w1_ref.dtype

    # layer 1: (TM, D) @ (D, H1) -> (TM, H1); MXU, f32 accumulation.
    h1 = jnp.dot(x_ref[...], w1_ref[...], preferred_element_type=jnp.float32)
    # bias + ReLU on the VPU; downcast fused so the live intermediate is cd.
    h1 = jnp.maximum(h1 + b1_ref[...], 0.0).astype(cd)

    # layer 2: (TM, H1) @ (H1, H2) -> (TM, H2)
    h2 = jnp.dot(h1, w2_ref[...], preferred_element_type=jnp.float32)
    h2 = jnp.maximum(h2 + b2_ref[...], 0.0).astype(cd)

    # layer 3 (mat-vec): w3_row (1,H2) contracted with h2 (TM,H2) over H2 ->
    # (1, TM).  Same NT pattern as flash-attention q@k^T, so no explicit
    # transpose of the (TM,H2) tile is needed and the output store is a single
    # lane-dense row (unmasked vst) instead of a masked (TM,1) column.
    out_row = lax.dot_general(
        w3_ref[...], h2,
        dimension_numbers=(((1,), (1,)), ((), ())),
        preferred_element_type=jnp.float32)
    o_ref[...] = (out_row + b3_ref[...]).astype(o_ref.dtype)


# --------------------------------------------------------------------------
# Wrapper helpers
# --------------------------------------------------------------------------
def _pad_axis(a, axis, target):
    pad = target - a.shape[axis]
    if pad <= 0:
        return a
    widths = [(0, 0)] * a.ndim
    widths[axis] = (0, pad)
    return jnp.pad(a, widths)


def prepare_params(params, *, compute_dtype=jnp.float32, lane_multiple=128):
    """One-time conversion of raw params to kernel-ready form.

    Casts weights to compute_dtype, zero-pads the hidden (N) dims to a lane
    multiple (zeros + zero bias -> padded activations are exactly 0, so the
    result is unchanged), and reshapes w3 to a row.  Call ONCE and reuse the
    result across forward passes so weights are not re-cast/re-padded per call.
    (On v6e/v7x a lane_multiple of 256 fills the 256-wide MXU; 128 is the
    portable minimum.)
    """
    w1, b1 = params["w1"], params["b1"].reshape(1, -1)
    w2, b2 = params["w2"], params["b2"].reshape(1, -1)
    w3, b3 = params["w3"], params["b3"].reshape(1, 1)
    h1p = _round_up(w1.shape[1], lane_multiple)
    h2p = _round_up(w2.shape[1], lane_multiple)

    w1 = _pad_axis(w1, 1, h1p)
    b1 = _pad_axis(b1, 1, h1p)
    w2 = _pad_axis(_pad_axis(w2, 0, h1p), 1, h2p)
    b2 = _pad_axis(b2, 1, h2p)
    w3_row = _pad_axis(w3.reshape(1, -1), 1, h2p)

    return {
        "w1": w1.astype(compute_dtype), "b1": b1.astype(jnp.float32),
        "w2": w2.astype(compute_dtype), "b2": b2.astype(jnp.float32),
        "w3_row": w3_row.astype(compute_dtype), "b3": b3.astype(jnp.float32),
    }


def _pick_tiling(batch, tile_m, row_align):
    """Balanced batch tiles: >=2 when possible (feeds both v7x TCs), near-equal
    sizes so padding waste is at most row_align-1 rows per tile."""
    max_tiles = max(1, _cdiv(batch, row_align))     # can't split below row_align
    want_tiles = max(2, _cdiv(batch, tile_m))       # >=2 for megacore
    n_target = min(want_tiles, max_tiles)
    tm = _round_up(_cdiv(batch, n_target), row_align)
    batch_p = _round_up(batch, tm)
    return tm, batch_p, batch_p // tm


def _vmem_limit_bytes(est):
    """Per-generation VMEM request: leave headroom under v7x's 64 MiB, exploit
    the 128 MiB on v5e/v6e."""
    try:
        phys = pltpu.get_tpu_info().vmem_capacity_bytes
    except Exception:
        phys = 64 * 2**20                      # conservative (v7x-sized) fallback
    if phys <= 64 * 2**20:
        cap = phys - (12 << 20)                # v7x: compiler-scratch headroom
    else:
        cap = min(phys - (16 << 20), 120 << 20)  # v5e / v6e
    return int(min(max(est, 16 << 20), cap))


# --------------------------------------------------------------------------
# Forward pass
# --------------------------------------------------------------------------
def fully_connected_network(x, params, *, tile_m=1024):
    """Forward pass of FullyConnectedNetwork as a batch-tiled fused Pallas kernel.

    x: [batch, input_dim] float32
    params: output of prepare_params() (preferred: prepare once, reuse), or the
            raw {"w1","b1","w2","b2","w3","b3"} dict (prepared on the fly).
    returns: [batch, 1] float32
    """
    if "w3_row" not in params:
        params = prepare_params(params)        # convenience path (per-call cast)

    w1, b1 = params["w1"], params["b1"]
    w2, b2 = params["w2"], params["b2"]
    w3_row, b3 = params["w3_row"], params["b3"]
    cd = w1.dtype
    itemsize = jnp.dtype(cd).itemsize

    batch, d_in = x.shape
    h1_dim, h2_dim = w1.shape[1], w2.shape[1]
    assert w1.shape[0] == d_in, (w1.shape, d_in)

    # Batch tile aligned to the sublane packing of the compute dtype
    # (8 rows f32, 16 rows bf16); balanced tiles, >=2 when batch allows.
    row_align = 8 * (4 // itemsize)
    tm, batch_p, n_tiles = _pick_tiling(batch, tile_m, row_align)

    x_c = x.astype(cd)
    if batch_p != batch:
        x_c = jnp.pad(x_c, ((0, batch_p - batch), (0, 0)))

    # VMEM estimate: single-buffered resident weights, double-buffered x/out
    # tiles, compute-dtype intermediates (f32 accumulators counted too).
    weights_bytes = (d_in * h1_dim + h1_dim * h2_dim + h2_dim) * itemsize \
        + (h1_dim + h2_dim + 1) * 4
    stream_bytes = 2 * (tm * d_in * itemsize + tm * 4)
    inter_bytes = tm * (h1_dim + h2_dim) * (4 + itemsize)
    est = weights_bytes + stream_bytes + inter_bytes + (2 << 20)
    vmem_limit = _vmem_limit_bytes(est)
    # TODO(synk): add a K-reduction grid axis (pl.when-init f32 accumulator) if
    # hidden dims grow so large that the weights no longer fit VMEM-resident.

    # Resident weights/biases: constant index_map + single buffer (DMA'd once).
    resident = lambda a: pl.BlockSpec(a.shape, lambda i: (0,) * a.ndim,
                                      pipeline_mode=pl.Buffered(1))

    flops = 2 * batch_p * (d_in * h1_dim + h1_dim * h2_dim + h2_dim)
    bytes_accessed = batch_p * d_in * itemsize + weights_bytes + batch_p * 4
    cost = pl.CostEstimate(flops=flops, transcendentals=0,
                           bytes_accessed=bytes_accessed)

    out = pl.pallas_call(
        mlp_kernel,
        out_shape=jax.ShapeDtypeStruct((1, batch_p), jnp.float32),
        grid=(n_tiles,),
        in_specs=[
            pl.BlockSpec((tm, d_in), lambda i: (i, 0)),   # x: tiled over batch
            resident(w1), resident(b1),
            resident(w2), resident(b2),
            resident(w3_row), resident(b3),
        ],
        out_specs=pl.BlockSpec((1, tm), lambda i: (0, i)),  # lane-dense row
        compiler_params=pltpu.CompilerParams(
            dimension_semantics=("parallel",),  # shard batch tiles across TCs
            vmem_limit_bytes=vmem_limit,
        ),
        cost_estimate=cost,
    )(x_c, w1, b1, w2, b2, w3_row, b3)

    # (1, batch_p) row-major already holds the batch scalars in order -> the
    # reshape to (batch_p, 1) is free; padded garbage rows are sliced off.
    return out.reshape(batch_p, 1)[:batch]


# --------------------------------------------------------------------------
# Reference / init (for the self-test)
# --------------------------------------------------------------------------
def init_params(key, input_dim, hidden_dim):
    """Mimic torch.nn.Linear default init: U(-1/sqrt(fan_in), 1/sqrt(fan_in))."""
    h2_dim = hidden_dim // 2
    dims = [(input_dim, hidden_dim), (hidden_dim, h2_dim), (h2_dim, 1)]
    params = {}
    for i, (fan_in, fan_out) in enumerate(dims, start=1):
        key, kw, kb = jax.random.split(key, 3)
        bound = 1.0 / jnp.sqrt(jnp.float32(fan_in))
        params[f"w{i}"] = jax.random.uniform(
            kw, (fan_in, fan_out), jnp.float32, -bound, bound)
        params[f"b{i}"] = jax.random.uniform(
            kb, (1, fan_out), jnp.float32, -bound, bound)
    return params


def reference_forward(x, params):
    h1 = jnp.maximum(
        jnp.dot(x, params["w1"], preferred_element_type=jnp.float32)
        + params["b1"], 0.0)
    h2 = jnp.maximum(
        jnp.dot(h1, params["w2"], preferred_element_type=jnp.float32)
        + params["b2"], 0.0)
    return jnp.dot(h2, params["w3"], preferred_element_type=jnp.float32) \
        + params["b3"]


if __name__ == "__main__":
    batch, input_dim, hidden_dim = 8, 16, 32

    key = jax.random.PRNGKey(0)
    key, kx = jax.random.split(key)
    x = jax.random.normal(kx, (batch, input_dim), jnp.float32)
    params = init_params(key, input_dim, hidden_dim)
    ref = reference_forward(x, params)

    # float32 path: matches the original torch float32 module's semantics.
    prep_f32 = prepare_params(params, compute_dtype=jnp.float32)
    out_f32 = jax.block_until_ready(fully_connected_network(x, prep_f32))
    assert out_f32.shape == (batch, 1), out_f32.shape
    assert jnp.allclose(out_f32, ref, atol=1e-4, rtol=1e-4), "f32 mismatch"

    # bf16 fast path: bf16 MXU operands, f32 accumulation, f32 bias/ReLU.
    prep_bf16 = prepare_params(params, compute_dtype=jnp.bfloat16)
    out_bf16 = jax.block_until_ready(fully_connected_network(x, prep_bf16))
    assert out_bf16.shape == (batch, 1), out_bf16.shape
    assert jnp.allclose(out_bf16, ref, atol=3e-2, rtol=3e-2), "bf16 mismatch"

    print("KERNEL_OK")
</pallas_src>

<mosaic_0001>
module attributes {stable_mosaic.version = 11 : i64} {
  func.func @mlp_kernel(%arg0: i32, %arg1: memref<8x16xf32, #tpu.memory_space<vmem>>, %arg2: memref<16x128xf32, #tpu.memory_space<vmem>>, %arg3: memref<1x128xf32, #tpu.memory_space<vmem>>, %arg4: memref<128x128xf32, #tpu.memory_space<vmem>>, %arg5: memref<1x128xf32, #tpu.memory_space<vmem>>, %arg6: memref<1x128xf32, #tpu.memory_space<vmem>>, %arg7: memref<1x1xf32, #tpu.memory_space<vmem>>, %arg8: memref<1x8xf32, #tpu.memory_space<vmem>>) attributes {dimension_semantics = [#tpu.dimension_semantics<parallel>], iteration_bounds = array<i64: 1>, scalar_prefetch = 0 : i64, scratch_operands = 0 : i64, tpu.core_type = #tpu.core_type<tc>, window_params = [{transform_indices = @transform_0, window_bounds = array<i64: 8, 16>}, {pipeline_mode = #tpu.pipeline_mode<synchronous>, transform_indices = @transform_1, window_bounds = array<i64: 16, 128>}, {pipeline_mode = #tpu.pipeline_mode<synchronous>, transform_indices = @transform_2, window_bounds = array<i64: 1, 128>}, {pipeline_mode = #tpu.pipeline_mode<synchronous>, transform_indices = @transform_3, window_bounds = array<i64: 128, 128>}, {pipeline_mode = #tpu.pipeline_mode<synchronous>, transform_indices = @transform_4, window_bounds = array<i64: 1, 128>}, {pipeline_mode = #tpu.pipeline_mode<synchronous>, transform_indices = @transform_5, window_bounds = array<i64: 1, 128>}, {pipeline_mode = #tpu.pipeline_mode<synchronous>, transform_indices = @transform_6, window_bounds = array<i64: 1, 1>}, {transform_indices = @transform_7, window_bounds = array<i64: 1, 8>}]} {
    %c0 = arith.constant 0 : index
    %c0_0 = arith.constant 0 : index
    %0 = vector.load %arg1[%c0, %c0_0] : memref<8x16xf32, #tpu.memory_space<vmem>>, vector<8x16xf32>
    %c0_1 = arith.constant 0 : index
    %c0_2 = arith.constant 0 : index
    %1 = vector.load %arg2[%c0_1, %c0_2] : memref<16x128xf32, #tpu.memory_space<vmem>>, vector<16x128xf32>
    %cst = arith.constant dense<0.000000e+00> : vector<8x128xf32>
    %2 = tpu.matmul %0, %1, %cst {dimension_numbers = #tpu.dot_dimension_numbers<[1], [0], [0], [1], [0, 0, 1, 1], [], []>} : vector<8x16xf32>, vector<16x128xf32>, vector<8x128xf32> -> vector<8x128xf32>
    %c0_3 = arith.constant 0 : index
    %c0_4 = arith.constant 0 : index
    %3 = vector.load %arg3[%c0_3, %c0_4] : memref<1x128xf32, #tpu.memory_space<vmem>>, vector<1x128xf32>
    %4 = vector.broadcast %3 : vector<1x128xf32> to vector<8x128xf32>
    %5 = arith.addf %2, %4 : vector<8x128xf32>
    %cst_5 = arith.constant 0.000000e+00 : f32
    %6 = vector.broadcast %cst_5 : f32 to vector<8x128xf32>
    %7 = arith.maximumf %5, %6 : vector<8x128xf32>
    %c0_6 = arith.constant 0 : index
    %c0_7 = arith.constant 0 : index
    %8 = vector.load %arg4[%c0_6, %c0_7] : memref<128x128xf32, #tpu.memory_space<vmem>>, vector<128x128xf32>
    %cst_8 = arith.constant dense<0.000000e+00> : vector<8x128xf32>
    %9 = tpu.matmul %7, %8, %cst_8 {dimension_numbers = #tpu.dot_dimension_numbers<[1], [0], [0], [1], [0, 0, 1, 1], [], []>} : vector<8x128xf32>, vector<128x128xf32>, vector<8x128xf32> -> vector<8x128xf32>
    %c0_9 = arith.constant 0 : index
    %c0_10 = arith.constant 0 : index
    %10 = vector.load %arg5[%c0_9, %c0_10] : memref<1x128xf32, #tpu.memory_space<vmem>>, vector<1x128xf32>
    %11 = vector.broadcast %10 : vector<1x128xf32> to vector<8x128xf32>
    %12 = arith.addf %9, %11 : vector<8x128xf32>
    %cst_11 = arith.constant 0.000000e+00 : f32
    %13 = vector.broadcast %cst_11 : f32 to vector<8x128xf32>
    %14 = arith.maximumf %12, %13 : vector<8x128xf32>
    %c0_12 = arith.constant 0 : index
    %c0_13 = arith.constant 0 : index
    %15 = vector.load %arg6[%c0_12, %c0_13] : memref<1x128xf32, #tpu.memory_space<vmem>>, vector<1x128xf32>
    %cst_14 = arith.constant dense<0.000000e+00> : vector<1x8xf32>
    %16 = tpu.matmul %15, %14, %cst_14 {dimension_numbers = #tpu.dot_dimension_numbers<[1], [1], [0], [0], [0, 0, 1, 0], [], []>} : vector<1x128xf32>, vector<8x128xf32>, vector<1x8xf32> -> vector<1x8xf32>
    %c0_15 = arith.constant 0 : index
    %c0_16 = arith.constant 0 : index
    %17 = vector.load %arg7[%c0_15, %c0_16] : memref<1x1xf32, #tpu.memory_space<vmem>>, vector<1x1xf32>
    %18 = vector.broadcast %17 : vector<1x1xf32> to vector<1x8xf32>
    %19 = arith.addf %16, %18 : vector<1x8xf32>
    %c0_17 = arith.constant 0 : index
    %c0_18 = arith.constant 0 : index
    %20 = vector.load %arg8[%c0_17, %c0_18] : memref<1x8xf32, #tpu.memory_space<vmem>>, vector<1x8xf32>
    tpu.vector_store %arg8[%c0_17, %c0_18], %19 {strides = array<i32>} : memref<1x8xf32, #tpu.memory_space<vmem>>, vector<1x8xf32>,
    return
  }
  func.func @transform_0(%arg0: i32) -> (i32, i32) {
    %c0_i32 = arith.constant 0 : i32
    %c0_i32_0 = arith.constant 0 : i32
    return %arg0, %c0_i32 : i32, i32
  }
  func.func @transform_1(%arg0: i32) -> (i32, i32) {
    %c0_i32 = arith.constant 0 : i32
    %c0_i32_0 = arith.constant 0 : i32
    %c0_i32_1 = arith.constant 0 : i32
    return %c0_i32, %c0_i32_0 : i32, i32
  }
  func.func @transform_2(%arg0: i32) -> (i32, i32) {
    %c0_i32 = arith.constant 0 : i32
    %c0_i32_0 = arith.constant 0 : i32
    %c0_i32_1 = arith.constant 0 : i32
    return %c0_i32, %c0_i32_0 : i32, i32
  }
  func.func @transform_3(%arg0: i32) -> (i32, i32) {
    %c0_i32 = arith.constant 0 : i32
    %c0_i32_0 = arith.constant 0 : i32
    %c0_i32_1 = arith.constant 0 : i32
    return %c0_i32, %c0_i32_0 : i32, i32
  }
  func.func @transform_4(%arg0: i32) -> (i32, i32) {
    %c0_i32 = arith.constant 0 : i32
    %c0_i32_0 = arith.constant 0 : i32
    %c0_i32_1 = arith.constant 0 : i32
    return %c0_i32, %c0_i32_0 : i32, i32
  }
  func.func @transform_5(%arg0: i32) -> (i32, i32) {
    %c0_i32 = arith.constant 0 : i32
    %c0_i32_0 = arith.constant 0 : i32
    %c0_i32_1 = arith.constant 0 : i32
    return %c0_i32, %c0_i32_0 : i32, i32
  }
  func.func @transform_6(%arg0: i32) -> (i32, i32) {
    %c0_i32 = arith.constant 0 : i32
    %c0_i32_0 = arith.constant 0 : i32
    %c0_i32_1 = arith.constant 0 : i32
    return %c0_i32, %c0_i32_0 : i32, i32
  }
  func.func @transform_7(%arg0: i32) -> (i32, i32) {
    %c0_i32 = arith.constant 0 : i32
    %c0_i32_0 = arith.constant 0 : i32
    return %c0_i32, %arg0 : i32, i32
  }
}

</mosaic_0001>

<llo_original>
// kernel: tpu_custom_call.1
$region0: #{tpu_custom_call.1}
  #allocation0 [shape = 'u32[]', space=smem, size = 0x4, offset = 0x4, fixed_abs, tag = 'smem constant byte address 0x4 - core index']
  #allocation1 [shape = 'u32[72,128]{1,0:T(1,128)}', space=vmem, size = 0x9000, scoped, tag = 'internal scratch']
  #allocation2 [shape = 'f32[1,1]{1,0:T(1,128)S(1)}', space=vmem, size = 0x200, scoped, tag = 'scoped memory for tpu_custom_call.1']
  %s0 = inlined_call_operand.hbm [shape: f32[8,16], index: 0, kind: input, shape index: {}]
  %s1 = inlined_call_operand.hbm [shape: f32[16,128], index: 1, kind: input, shape index: {}]
  %s2 = inlined_call_operand.vmem [shape: f32[1,128], index: 2, kind: input, shape index: {}]
  %s3 = inlined_call_operand.hbm [shape: f32[128,128], index: 3, kind: input, shape index: {}]
  %s4 = inlined_call_operand.vmem [shape: f32[1,128], index: 4, kind: input, shape index: {}]
  %s5 = inlined_call_operand.vmem [shape: f32[1,128], index: 5, kind: input, shape index: {}]
  %s6 = inlined_call_operand.<no memory space> [shape: f32[1,1], index: 6, kind: input, shape index: {}]
  %s7 = inlined_call_operand.hbm [shape: f32[1,8], index: 7, kind: output, shape index: {}]
  %s8 = sld [smem:[#allocation0]]
  $region50: #{tpu_custom_call.1} parent=0
    _
  %s10 = ssub.s32 1, %s8
  %s11 = scalar_select 0, %s10, %s8
  %v12 = vstv %s6
  %13 = vst [vmem:[#allocation2] sm:$0x1] %v12
  $region1: #{tpu_custom_call.1} parent=0
    #allocation3 [shape = 'u8[4096]{0}', space=vmem, size = 0x1000, scoped, tag = 'input window, operand 0, single buffered']
    #allocation4 [shape = 's32[1]{0}', space=sflag, size = 0x4, scoped, tag = 'scoped memory for tpu_custom_call.1']
    #allocation5 [shape = 's32[1]{0}', space=sflag, size = 0x4, scoped, tag = 'scoped memory for tpu_custom_call.1']
    #allocation6 [shape = 'u8[8192]{0}', space=vmem, size = 0x2000, scoped, tag = 'input window, operand 1, single buffered']
    #allocation7 [shape = 's32[1]{0}', space=sflag, size = 0x4, scoped, tag = 'scoped memory for tpu_custom_call.1']
    #allocation8 [shape = 'u8[65536]{0}', space=vmem, size = 0x10000, scoped, tag = 'input window, operand 3, single buffered']
    #allocation9 [shape = 'u8[512]{0}', space=vmem, size = 0x400, scoped, tag = 'output window, operand 0, single buffered']
    %14 = vsyncpa [#allocation4], 0
    %15 = vsyncpa [#allocation7], 0
    %16 = vsyncpa [#allocation5], 0
    // Predicated region
    $region2: #{tpu_custom_call.1} parent=1 // pred_check
      _
    $region3: #{tpu_custom_call.1} parent=1 // pred_check_branch
      %18 = sbr.rel (0) target = $region5
    $region4: #{tpu_custom_call.1} parent=1 // pred_region
      %20 = vsyncadd [#allocation4], 0
      %s22 = sshll.u32 %s0, 4
      %s23 = int_to_ptr.hbm [resolvable:$true] %s22
      %s24 = sshll.u32 [#allocation3], 4
      %s25 = int_to_ptr.vmem [resolvable:$true] %s24
      %27 = dma.hbm_to_vmem [thread:$0]  %s23, 128, %s25, [#allocation4]
    $region5: #{tpu_custom_call.1} parent=1 // pred_fallthru
      _
    // Predicated region
    $region6: #{tpu_custom_call.1} parent=1 // pred_check
      _
    $region7: #{tpu_custom_call.1} parent=1 // pred_check_branch
      %29 = sbr.rel (0) target = $region9
    $region8: #{tpu_custom_call.1} parent=1 // pred_region
      %31 = vsyncadd [#allocation7], 0
      %s32 = sshll.u32 %s1, 4
      %s33 = int_to_ptr.hbm [resolvable:$true] %s32
      %s34 = sshll.u32 [#allocation6], 4
      %s35 = int_to_ptr.vmem [resolvable:$true] %s34
      %40 = dma.hbm_to_vmem [thread:$0]  %s33, 256, %s35, [#allocation7], 128, 128, 8
    $region9: #{tpu_custom_call.1} parent=1 // pred_fallthru
      _
    // Predicated region
    $region10: #{tpu_custom_call.1} parent=1 // pred_check
      _
    $region11: #{tpu_custom_call.1} parent=1 // pred_check_branch
      %42 = sbr.rel (0) target = $region13
    $region12: #{tpu_custom_call.1} parent=1 // pred_region
      _
    $region13: #{tpu_custom_call.1} parent=1 // pred_fallthru
      _
    // Predicated region
    $region14: #{tpu_custom_call.1} parent=1 // pred_check
      _
    $region15: #{tpu_custom_call.1} parent=1 // pred_check_branch
      %44 = sbr.rel (0) target = $region17
    $region16: #{tpu_custom_call.1} parent=1 // pred_region
      %46 = vsyncadd [#allocation7], 0
      %s47 = sshll.u32 %s3, 4
      %s48 = int_to_ptr.hbm [resolvable:$true] %s47
      %s49 = sshll.u32 [#allocation8], 4
      %s50 = int_to_ptr.vmem [resolvable:$true] %s49
      %55 = dma.hbm_to_vmem [thread:$0]  %s48, 2048, %s50, [#allocation7], 128, 128, 8
    $region17: #{tpu_custom_call.1} parent=1 // pred_fallthru
      _
    // Predicated region
    $region18: #{tpu_custom_call.1} parent=1 // pred_check
      _
    $region19: #{tpu_custom_call.1} parent=1 // pred_check_branch
      %57 = sbr.rel (0) target = $region21
    $region20: #{tpu_custom_call.1} parent=1 // pred_region
      _
    $region21: #{tpu_custom_call.1} parent=1 // pred_fallthru
      _
    // Predicated region
    $region22: #{tpu_custom_call.1} parent=1 // pred_check
      _
    $region23: #{tpu_custom_call.1} parent=1 // pred_check_branch
      %59 = sbr.rel (0) target = $region25
    $region24: #{tpu_custom_call.1} parent=1 // pred_region
      _
    $region25: #{tpu_custom_call.1} parent=1 // pred_fallthru
      _
    // Predicated region
    $region26: #{tpu_custom_call.1} parent=1 // pred_check
      _
    $region27: #{tpu_custom_call.1} parent=1 // pred_check_branch
      %61 = sbr.rel (0) target = $region29
    $region28: #{tpu_custom_call.1} parent=1 // pred_region
      _
    $region29: #{tpu_custom_call.1} parent=1 // pred_fallthru
      _
    // Predicated region
    $region30: #{tpu_custom_call.1} parent=1 // pred_check
      _
    $region31: #{tpu_custom_call.1} parent=1 // pred_check_branch
      %63 = sbr.rel (0) target = $region33
    $region32: #{tpu_custom_call.1} parent=1 // pred_region
      %65 = dma.done [#allocation4], 128
    $region33: #{tpu_custom_call.1} parent=1 // pred_fallthru
      _
    // Predicated region
    $region34: #{tpu_custom_call.1} parent=1 // pred_check
      _
    $region35: #{tpu_custom_call.1} parent=1 // pred_check_branch
      %67 = sbr.rel (0) target = $region37
    $region36: #{tpu_custom_call.1} parent=1 // pred_region
      %69 = dma.done [#allocation7], 256
    $region37: #{tpu_custom_call.1} parent=1 // pred_fallthru
      _
    // Predicated region
    $region38: #{tpu_custom_call.1} parent=1 // pred_check
      _
    $region39: #{tpu_custom_call.1} parent=1 // pred_check_branch
      %71 = sbr.rel (0) target = $region41
    $region40: #{tpu_custom_call.1} parent=1 // pred_region
      %73 = dma.done [#allocation7], 2048
    $region41: #{tpu_custom_call.1} parent=1 // pred_fallthru
      _
    %v74 = vld [vmem:[#allocation3] sm:$0xff]
    %v75 = vld [vmem:[#allocation6] sm:$0xff]
    %v76 = vld [vmem:[#allocation6 + $0x8] sm:$0xff]
    %v77 = vld [vmem:[%s2] sm:$0x1]
    %v79 = vperm.slane %v77, 0
    %vm81 = vcmask 130048
    %v83 = vsel %vm81, %v74, 0
    %85 = vmatpush.msra.mxu0 0.0
    %86 = vmatpush.msra.mxu0 0.0
    %87 = vmatpush.msra.mxu0 0.0
    %88 = vmatpush.msra.mxu0 0.0
    %89 = vmatpush.msra.mxu0 0.0
    %90 = vmatpush.msra.mxu0 0.0
    %91 = vmatpush.msra.mxu0 0.0
    %92 = vmatpush.msra.mxu0 0.0
    %93 = vmatpush.msra.mxu0 0.0
    %94 = vmatpush.msra.mxu0 0.0
    %95 = vmatpush.msra.mxu0 0.0
    %96 = vmatpush.msra.mxu0 0.0
    %97 = vmatpush.msra.mxu0 0.0
    %98 = vmatpush.msra.mxu0 0.0
    %99 = vmatpush.msra.mxu0 %v76
    %100 = vmatpush.msra.mxu0 %v75
    %101 = vmatmul.f32.gmra.mxu0 %v83
    %v102 = vpop.f32.mrf.mxu0
    %v103 = vadd.f32 %v79, %v102
    %104 = vdwg.mxu0
    %v105 = vmax.f32 %v103, 0.0
    %v106 = vld [vmem:[#allocation8] sm:$0xff]
    %v107 = vld [vmem:[#allocation8 + $0x8] sm:$0xff]
    %v108 = vld [vmem:[#allocation8 + $0x10] sm:$0xff]
    %v109 = vld [vmem:[#allocation8 + $0x18] sm:$0xff]
    %v110 = vld [vmem:[#allocation8 + $0x20] sm:$0xff]
    %v111 = vld [vmem:[#allocation8 + $0x28] sm:$0xff]
    %v112 = vld [vmem:[#allocation8 + $0x30] sm:$0xff]
    %v113 = vld [vmem:[#allocation8 + $0x38] sm:$0xff]
    %v114 = vld [vmem:[#allocation8 + $0x40] sm:$0xff]
    %v115 = vld [vmem:[#allocation8 + $0x48] sm:$0xff]
    %v116 = vld [vmem:[#allocation8 + $0x50] sm:$0xff]
    %v117 = vld [vmem:[#allocation8 + $0x58] sm:$0xff]
    %v118 = vld [vmem:[#allocation8 + $0x60] sm:$0xff]
    %v119 = vld [vmem:[#allocation8 + $0x68] sm:$0xff]
    %v120 = vld [vmem:[#allocation8 + $0x70] sm:$0xff]
    %v121 = vld [vmem:[#allocation8 + $0x78] sm:$0xff]
    %v122 = vld [vmem:[%s4] sm:$0x1]
    %v124 = vperm.slane %v122, 0
    %126 = vmatpush.msra.mxu0 %v121
    %127 = vmatpush.msra.mxu0 %v120
    %128 = vmatpush.msra.mxu0 %v119
    %129 = vmatpush.msra.mxu0 %v118
    %130 = vmatpush.msra.mxu0 %v117
    %131 = vmatpush.msra.mxu0 %v116
    %132 = vmatpush.msra.mxu0 %v115
    %133 = vmatpush.msra.mxu0 %v114
    %134 = vmatpush.msra.mxu0 %v113
    %135 = vmatpush.msra.mxu0 %v112
    %136 = vmatpush.msra.mxu0 %v111
    %137 = vmatpush.msra.mxu0 %v110
    %138 = vmatpush.msra.mxu0 %v109
    %139 = vmatpush.msra.mxu0 %v108
    %140 = vmatpush.msra.mxu0 %v107
    %141 = vmatpush.msra.mxu0 %v106
    %142 = vmatmul.f32.gmra.mxu0 %v105
    %v143 = vpop.f32.mrf.mxu0
    %v144 = vadd.f32 %v124, %v143
    %145 = vdwg.mxu0
    %v146 = vmax.f32 %v144, 0.0
    %v147 = vld [vmem:[%s5] sm:$0x1]
    %v148 = vld [vmem:[#allocation2] sm:$0x1]
    %150 = vset.pattern.permute.xlu0 0
    %151 = vperm.xlu0 %150, %v148
    %v152 = vpop.permute.xlu0 %151
    %v154 = vperm.slane %v152, 0
    %155 = vmatpush.xpose.msra.mxu0 0.0
    %156 = vmatpush.xpose.msra.mxu0 0.0
    %157 = vmatpush.xpose.msra.mxu0 0.0
    %158 = vmatpush.xpose.msra.mxu0 0.0
    %159 = vmatpush.xpose.msra.mxu0 0.0
    %160 = vmatpush.xpose.msra.mxu0 0.0
    %161 = vmatpush.xpose.msra.mxu0 0.0
    %162 = vmatpush.xpose.msra.mxu0 0.0
    %163 = vmatpush.xpose.msra.mxu0 0.0
    %164 = vmatpush.xpose.msra.mxu0 0.0
    %165 = vmatpush.xpose.msra.mxu0 0.0
    %166 = vmatpush.xpose.msra.mxu0 0.0
    %167 = vmatpush.xpose.msra.mxu0 0.0
    %168 = vmatpush.xpose.msra.mxu0 0.0
    %169 = vmatpush.xpose.msra.mxu0 0.0
    %170 = vmatpush.xpose.msra.mxu0 %v146
    %171 = vmatmul.f32.gmra.mxu0 %v147
    %v172 = vpop.f32.mrf.mxu0
    %v173 = vadd.f32 %v154, %v172
    %174 = vdwg.mxu0
    %vm175 = vcmask 57344
    %176 = vst.msk [vmem:[#allocation9] sm:$0x1] %vm175, %v173
    // Predicated region
    $region42: #{tpu_custom_call.1} parent=1 // pred_check
      _
    $region43: #{tpu_custom_call.1} parent=1 // pred_check_branch
      %178 = sbr.rel (0) target = $region45
    $region44: #{tpu_custom_call.1} parent=1 // pred_region
      %180 = vsyncadd [#allocation5], 0
      %s182 = sshll.u32 [#allocation9], 4
      %s183 = int_to_ptr.vmem [resolvable:$true] %s182
      %s184 = sshll.u32 %s7, 4
      %s185 = int_to_ptr.hbm [resolvable:$true] %s184
      %187 = dma.vmem_to_hbm [thread:$0]  %s183, 16, %s185, [#allocation5]
    $region45: #{tpu_custom_call.1} parent=1 // pred_fallthru
      _
    // Predicated region
    $region46: #{tpu_custom_call.1} parent=1 // pred_check
      _
    $region47: #{tpu_custom_call.1} parent=1 // pred_check_branch
      %189 = sbr.rel (0) target = $region49
    $region48: #{tpu_custom_call.1} parent=1 // pred_region
      %191 = dma.done [#allocation5], 16
    $region49: #{tpu_custom_call.1} parent=1 // pred_fallthru
      _
    %192 = vsyncpa [#allocation4], 1
    %193 = vsyncpa [#allocation7], 1
    %194 = vsyncpa [#allocation5], 1

</llo_original>
